<compile_context>
chip_gen: v7x
topology: tpu7x:2x2x1
jax: 0.10.0
libtpu: 0.0.40
codegen_flags: <defaults>
</compile_context>

<pallas_src>
import jax
import jax.numpy as jnp
from jax.experimental import pallas as pl
from jax.experimental.pallas import tpu as pltpu


def _cls_loss_kernel(x_ref, t_ref, o_ref):
    """Accumulates sum_{i,c} (C * w_ic) * bce_ic over this core's row tiles into
    the resident (8, C) f32 output block. Normalization 1/(N*C*C) is applied in
    the wrapper."""
    step = pl.program_id(1)

    @pl.when(step == 0)
    def _():
        o_ref[...] = jnp.zeros_like(o_ref)

    x = x_ref[...].astype(jnp.float32)            # (TN, C) logits
    tar = t_ref[...].astype(jnp.float32)          # (TN, C) targets in {0, 1}
    tn, c = x.shape

    # Per-row positive count == C * pos_frac (the /C is folded into final scale).
    raw_pos = jnp.sum(tar, axis=1, keepdims=True)               # (TN, 1)

    # BCE with logits + torch's -100 log clamp, fused:
    #   -log(sigmoid(x))     = softplus(x) - x  -> clamp at 100
    #   -log(1 - sigmoid(x)) = softplus(x)      -> clamp at 100
    # TODO(synk): for x > ~17 torch's sigmoid->log path underflows (1-p == 0) and
    # clamps to -100; the logits form returns the mathematically correct ~ -x.
    sp = jnp.maximum(x, 0.0) + jnp.log(1.0 + jnp.exp(-jnp.abs(x)))
    a = jnp.minimum(sp - x, 100.0)
    b = jnp.minimum(sp, 100.0)
    bce = b + tar * (a - b)                                     # (TN, C)

    # C * weight with a hard select (matches torch's mask assignment for 0/1
    # targets). Zero-padded rows: raw_pos == 0 and t == 0 -> weight 0 -> 0 contrib.
    w_c = jnp.where(tar == 1.0, c - raw_pos, raw_pos)           # (TN, C)

    partial = w_c * bce                                         # (TN, C)
    # Row tree-reduce onto the (8, C) accumulator: element-wise adds of sublane
    # slabs (pure VPU), no cross-lane XLU work in the steady-state loop.
    o_ref[...] += partial.reshape(tn // 8, 8, c).sum(axis=0)


def _round_up(v, m):
    return ((v + m - 1) // m) * m


def cls_loss(use_for_cls_loss, target, *, row_tile=None, num_parallel=2,
             vmem_input_budget_bytes=16 * 1024 * 1024):
    """use_for_cls_loss: (N, C) logits; target: (N, C) with 0/1 entries.
    Returns the scalar loss (float32)."""
    x = jnp.asarray(use_for_cls_loss)
    n, c = x.shape

    # Targets are 0/1 by contract -> ship them as int8 (exact, 4x less HBM
    # traffic than f32); the kernel casts back to f32.
    tgt = jnp.asarray(target).astype(jnp.int8)

    # Row tile: multiple of 32 sublanes (valid for f32 and int8 blocks), capped
    # at 4096 rows, sized so double-buffered input tiles fit the scoped VMEM of
    # every generation (v7x: 32 MiB scoped default).
    if row_tile is None:
        per_row_bytes = c * (x.dtype.itemsize + tgt.dtype.itemsize)
        tn = vmem_input_budget_bytes // (2 * per_row_bytes)
        tn = max(32, min(4096, (tn // 32) * 32))
    else:
        tn = max(32, _round_up(row_tile, 32))
    tn = min(tn, _round_up(n, 32))

    # Shard row tiles across `num_parallel` megacore slots (v7x: 2 TCs). On
    # single-core chips the "parallel" axis just runs serially.
    num_tiles = -(-n // tn)
    p = num_parallel if num_tiles >= num_parallel else 1
    steps = -(-num_tiles // p)

    # Zero-pad N up to p * steps * tn: padded rows have weight 0 so they add
    # exactly 0, while the final scale still divides by the original N.
    n_pad = p * steps * tn
    if n_pad != n:
        x = jnp.pad(x, ((0, n_pad - n), (0, 0)))
        tgt = jnp.pad(tgt, ((0, n_pad - n), (0, 0)))

    partials = pl.pallas_call(
        _cls_loss_kernel,
        out_shape=jax.ShapeDtypeStruct((p * 8, c), jnp.float32),
        grid_spec=pltpu.PrefetchScalarGridSpec(
            num_scalar_prefetch=0,
            grid=(p, steps),
            in_specs=[
                pl.BlockSpec((tn, c), lambda pi, i: (pi * steps + i, 0)),
                pl.BlockSpec((tn, c), lambda pi, i: (pi * steps + i, 0)),
            ],
            out_specs=pl.BlockSpec((8, c), lambda pi, i: (pi, 0)),
        ),
        compiler_params=pltpu.CompilerParams(
            dimension_semantics=("parallel", "arbitrary"),
            vmem_limit_bytes=32 * 1024 * 1024,
        ),
    )(x, tgt)

    # Final cross-lane / cross-core reduce + all folded normalizations:
    # 1/(N*C*C) covers the /C inside pos/neg_frac, the /C of the per-sample BCE
    # mean, and the /N over samples.
    final_scale = 1.0 / (float(n) * float(c) * float(c))
    return jnp.sum(partials) * final_scale


def _cls_loss_ref(x, tgt):
    """Pure-JAX reference mirroring the PyTorch forward (sigmoid -> log -> clamp)."""
    x = jnp.asarray(x).astype(jnp.float32)
    tgt = jnp.asarray(tgt).astype(jnp.float32)
    n, c = x.shape
    pos_frac = jnp.sum(tgt, axis=1, keepdims=True) / c
    neg_frac = jnp.sum(1.0 - tgt, axis=1, keepdims=True) / c
    p = jax.nn.sigmoid(x)
    log_p = jnp.maximum(jnp.log(p), -100.0)
    log_1mp = jnp.maximum(jnp.log(1.0 - p), -100.0)
    bce = -(tgt * log_p + (1.0 - tgt) * log_1mp)
    w = jnp.where(tgt == 1.0, neg_frac, pos_frac)
    return jnp.mean(jnp.sum(w * bce, axis=1) / c)


if __name__ == "__main__":
    key = jax.random.PRNGKey(0)
    k_x, k_t, k_x2, k_t2 = jax.random.split(key, 4)

    # Small (N, C) case as in the module docstring: single tile, P=1 path.
    N, C = 8, 128
    x = jax.random.normal(k_x, (N, C), dtype=jnp.float32)
    target = jax.random.bernoulli(k_t, p=0.7, shape=(N, C)).astype(jnp.float32)

    loss = cls_loss(x, target)
    jax.block_until_ready(loss)
    ref = _cls_loss_ref(x, target)
    assert jnp.allclose(loss, ref, rtol=2e-4, atol=1e-6), (loss, ref)

    # Multi-tile case: exercises the (parallel, arbitrary) 2-D grid, row padding,
    # the cross-step accumulator, and bool targets shipped as int8.
    N2, C2 = 200, 128
    x2 = jax.random.normal(k_x2, (N2, C2), dtype=jnp.float32)
    t2 = jax.random.bernoulli(k_t2, p=0.3, shape=(N2, C2))   # bool targets
    loss2 = cls_loss(x2, t2, row_tile=32)
    jax.block_until_ready(loss2)
    ref2 = _cls_loss_ref(x2, t2)
    assert jnp.allclose(loss2, ref2, rtol=2e-4, atol=1e-6), (loss2, ref2)

    print("KERNEL_OK")
</pallas_src>

<mosaic_0001>
module attributes {stable_mosaic.version = 11 : i64} {
  func.func @_cls_loss_kernel(%arg0: i32, %arg1: i32, %arg2: memref<32x128xf32, #tpu.memory_space<vmem>>, %arg3: memref<32x128xi8, #tpu.memory_space<vmem>>, %arg4: memref<8x128xf32, #tpu.memory_space<vmem>>) attributes {dimension_semantics = [#tpu.dimension_semantics<parallel>, #tpu.dimension_semantics<arbitrary>], iteration_bounds = array<i64: 1, 1>, scalar_prefetch = 0 : i64, scratch_operands = 0 : i64, tpu.core_type = #tpu.core_type<tc>, window_params = [{transform_indices = @transform_0, window_bounds = array<i64: 32, 128>}, {transform_indices = @transform_1, window_bounds = array<i64: 32, 128>}, {transform_indices = @transform_2, window_bounds = array<i64: 8, 128>}]} {
    %c0_i32 = arith.constant 0 : i32
    %0 = arith.cmpi eq, %arg1, %c0_i32 : i32
    %1 = arith.extui %0 : i1 to i32
    %c0_i32_0 = arith.constant 0 : i32
    %2 = arith.cmpi ne, %1, %c0_i32_0 : i32
    scf.if %2 {
      %cst_16 = arith.constant 0.000000e+00 : f32
      %41 = vector.broadcast %cst_16 : f32 to vector<8x128xf32>
      %c0_17 = arith.constant 0 : index
      %c0_18 = arith.constant 0 : index
      %42 = vector.load %arg4[%c0_17, %c0_18] : memref<8x128xf32, #tpu.memory_space<vmem>>, vector<8x128xf32>
      tpu.vector_store %arg4[%c0_17, %c0_18], %41 {strides = array<i32>} : memref<8x128xf32, #tpu.memory_space<vmem>>, vector<8x128xf32>,
    } else {
    }
    %c0 = arith.constant 0 : index
    %c0_1 = arith.constant 0 : index
    %3 = vector.load %arg2[%c0, %c0_1] : memref<32x128xf32, #tpu.memory_space<vmem>>, vector<32x128xf32>
    %c0_2 = arith.constant 0 : index
    %c0_3 = arith.constant 0 : index
    %4 = vector.load %arg3[%c0_2, %c0_3] : memref<32x128xi8, #tpu.memory_space<vmem>>, vector<32x128xi8>
    %5 = arith.sitofp %4 : vector<32x128xi8> to vector<32x128xf32>
    %cst = arith.constant dense<0.000000e+00> : vector<32xf32>
    %6 = vector.multi_reduction <add>, %5, %cst [1] : vector<32x128xf32> to vector<32xf32>
    %7 = vector.shape_cast %6 : vector<32xf32> to vector<32x1xf32>
    %cst_4 = arith.constant 0.000000e+00 : f32
    %8 = vector.broadcast %cst_4 : f32 to vector<32x128xf32>
    %9 = arith.maximumf %3, %8 : vector<32x128xf32>
    %10 = math.absf %3 : vector<32x128xf32>
    %cst_5 = arith.constant 0.000000e+00 : f32
    %11 = vector.broadcast %cst_5 : f32 to vector<32x128xf32>
    %12 = arith.subf %11, %10 : vector<32x128xf32>
    %13 = math.exp %12 : vector<32x128xf32>
    %cst_6 = arith.constant 1.000000e+00 : f32
    %14 = vector.broadcast %cst_6 : f32 to vector<32x128xf32>
    %15 = arith.addf %14, %13 : vector<32x128xf32>
    %16 = math.log %15 : vector<32x128xf32>
    %17 = arith.addf %9, %16 : vector<32x128xf32>
    %18 = arith.subf %17, %3 : vector<32x128xf32>
    %cst_7 = arith.constant 1.000000e+02 : f32
    %19 = vector.broadcast %cst_7 : f32 to vector<32x128xf32>
    %20 = arith.minimumf %18, %19 : vector<32x128xf32>
    %cst_8 = arith.constant 1.000000e+02 : f32
    %21 = vector.broadcast %cst_8 : f32 to vector<32x128xf32>
    %22 = arith.minimumf %17, %21 : vector<32x128xf32>
    %23 = arith.subf %20, %22 : vector<32x128xf32>
    %24 = arith.mulf %5, %23 : vector<32x128xf32>
    %25 = arith.addf %22, %24 : vector<32x128xf32>
    %cst_9 = arith.constant 1.000000e+00 : f32
    %26 = vector.broadcast %cst_9 : f32 to vector<32x128xf32>
    %27 = arith.cmpf oeq, %5, %26 : vector<32x128xf32>
    %cst_10 = arith.constant 1.280000e+02 : f32
    %28 = vector.broadcast %cst_10 : f32 to vector<32x1xf32>
    %29 = arith.subf %28, %7 : vector<32x1xf32>
    %30 = vector.shape_cast %29 : vector<32x1xf32> to vector<32x1xf32>
    %31 = vector.broadcast %30 : vector<32x1xf32> to vector<32x128xf32>
    %32 = vector.shape_cast %7 : vector<32x1xf32> to vector<32x1xf32>
    %33 = vector.broadcast %32 : vector<32x1xf32> to vector<32x128xf32>
    %34 = arith.select %27, %31, %33 : vector<32x128xi1>, vector<32x128xf32>
    %35 = arith.mulf %34, %25 : vector<32x128xf32>
    %c0_11 = arith.constant 0 : index
    %c0_12 = arith.constant 0 : index
    %36 = vector.load %arg4[%c0_11, %c0_12] : memref<8x128xf32, #tpu.memory_space<vmem>>, vector<8x128xf32>
    %37 = vector.shape_cast %35 : vector<32x128xf32> to vector<4x8x128xf32>
    %cst_13 = arith.constant dense<0.000000e+00> : vector<8x128xf32>
    %38 = vector.multi_reduction <add>, %37, %cst_13 [0] : vector<4x8x128xf32> to vector<8x128xf32>
    %39 = arith.addf %36, %38 : vector<8x128xf32>
    %c0_14 = arith.constant 0 : index
    %c0_15 = arith.constant 0 : index
    %40 = vector.load %arg4[%c0_14, %c0_15] : memref<8x128xf32, #tpu.memory_space<vmem>>, vector<8x128xf32>
    tpu.vector_store %arg4[%c0_14, %c0_15], %39 {strides = array<i32>} : memref<8x128xf32, #tpu.memory_space<vmem>>, vector<8x128xf32>,
    return
  }
  func.func @transform_0(%arg0: i32, %arg1: i32) -> (i32, i32) {
    %c1_i32 = arith.constant 1 : i32
    %0 = arith.muli %arg0, %c1_i32 : i32
    %1 = arith.addi %0, %arg1 : i32
    %c0_i32 = arith.constant 0 : i32
    %c0_i32_0 = arith.constant 0 : i32
    return %1, %c0_i32 : i32, i32
  }
  func.func @transform_1(%arg0: i32, %arg1: i32) -> (i32, i32) {
    %c1_i32 = arith.constant 1 : i32
    %0 = arith.muli %arg0, %c1_i32 : i32
    %1 = arith.addi %0, %arg1 : i32
    %c0_i32 = arith.constant 0 : i32
    %c0_i32_0 = arith.constant 0 : i32
    return %1, %c0_i32 : i32, i32
  }
  func.func @transform_2(%arg0: i32, %arg1: i32) -> (i32, i32) {
    %c0_i32 = arith.constant 0 : i32
    %c0_i32_0 = arith.constant 0 : i32
    return %arg0, %c0_i32 : i32, i32
  }
}

</mosaic_0001>

<llo_original>
// kernel: tpu_custom_call.1
$region0: #{tpu_custom_call.1}
  #allocation0 [shape = 'u32[]', space=smem, size = 0x4, offset = 0x4, fixed_abs, tag = 'smem constant byte address 0x4 - core index']
  #allocation1 [shape = 'u32[144,128]{1,0:T(1,128)}', space=vmem, size = 0x12000, scoped, tag = 'internal scratch']
  %s0 = inlined_call_operand.hbm [shape: f32[32,128], index: 0, kind: input, shape index: {}]
  %s1 = inlined_call_operand.hbm [shape: s8[32,128], index: 1, kind: input, shape index: {}]
  %s2 = inlined_call_operand.hbm [shape: f32[8,128], index: 2, kind: output, shape index: {}]
  %s3 = sld [smem:[#allocation0]]
  $region30: #{tpu_custom_call.1} parent=0
    _
  %s5 = ssub.s32 1, %s3
  %s6 = scalar_select 0, %s5, %s3
  $region1: #{tpu_custom_call.1} parent=0
    #allocation2 [shape = 'u8[16384]{0}', space=vmem, size = 0x4000, scoped, tag = 'input window, operand 0, single buffered']
    #allocation3 [shape = 's32[1]{0}', space=sflag, size = 0x4, scoped, tag = 'scoped memory for tpu_custom_call.1']
    #allocation4 [shape = 's32[1]{0}', space=sflag, size = 0x4, scoped, tag = 'scoped memory for tpu_custom_call.1']
    #allocation5 [shape = 'u8[4096]{0}', space=vmem, size = 0x1000, scoped, tag = 'input window, operand 1, single buffered']
    #allocation6 [shape = 's32[1]{0}', space=sflag, size = 0x4, scoped, tag = 'scoped memory for tpu_custom_call.1']
    #allocation7 [shape = 'u8[4096]{0}', space=vmem, size = 0x1000, scoped, tag = 'output window, operand 0, single buffered']
    %7 = vsyncpa [#allocation3], 0
    %8 = vsyncpa [#allocation6], 0
    %9 = vsyncpa [#allocation4], 0
    // Predicated region
    $region2: #{tpu_custom_call.1} parent=1 // pred_check
      _
    $region3: #{tpu_custom_call.1} parent=1 // pred_check_branch
      %11 = sbr.rel (0) target = $region5
    $region4: #{tpu_custom_call.1} parent=1 // pred_region
      %s12 = sadd.s32 0, 0
      %s13 = smul.u32 4, %s12
      %s15 = ssub.s32 512, 512
      %16 = vsyncadd [#allocation3], %s15
      %s17 = smul.addr %s13, 128
      %s18 = scalar_lea.hbm %s0, %s17
      %s19 = sshll.u32 [#allocation2], 4
      %s20 = int_to_ptr.vmem [resolvable:$true] %s19
      %25 = dma.hbm_to_vmem [thread:$0]  %s18, 512, %s20, [#allocation3], 128, 128, 8
    $region5: #{tpu_custom_call.1} parent=1 // pred_fallthru
      _
    // Predicated region
    $region6: #{tpu_custom_call.1} parent=1 // pred_check
      _
    $region7: #{tpu_custom_call.1} parent=1 // pred_check_branch
      %27 = sbr.rel (0) target = $region9
    $region8: #{tpu_custom_call.1} parent=1 // pred_region
      %s28 = sadd.s32 0, 0
      %s30 = ssub.s32 128, 128
      %31 = vsyncadd [#allocation6], %s30
      %s32 = smul.addr %s28, 128
      %s33 = scalar_lea.hbm %s1, %s32
      %s35 = sshll.u32 [#allocation5], 4
      %s36 = int_to_ptr.vmem [resolvable:$true] %s35
      %38 = dma.hbm_to_vmem [thread:$0]  %s33, 128, %s36, [#allocation6]
    $region9: #{tpu_custom_call.1} parent=1 // pred_fallthru
      _
    // Predicated region
    $region10: #{tpu_custom_call.1} parent=1 // pred_check
      _
    $region11: #{tpu_custom_call.1} parent=1 // pred_check_branch
      %40 = sbr.rel (0) target = $region13
    $region12: #{tpu_custom_call.1} parent=1 // pred_region
      %41 = dma.done [#allocation3], 512
    $region13: #{tpu_custom_call.1} parent=1 // pred_fallthru
      _
    // Predicated region
    $region14: #{tpu_custom_call.1} parent=1 // pred_check
      _
    $region15: #{tpu_custom_call.1} parent=1 // pred_check_branch
      %43 = sbr.rel (0) target = $region17
    $region16: #{tpu_custom_call.1} parent=1 // pred_region
      %44 = dma.done [#allocation6], 128
    $region17: #{tpu_custom_call.1} parent=1 // pred_fallthru
      _
    %s45 = sadd.s32 0, 0
    %s46 = smul.u32 4, %s45
    %s47 = sadd.s32 0, 0
    %p48 = scmp.eq.s32.totalorder 0, 0
    // Predicated region
    $region18: #{tpu_custom_call.1} parent=1 // pred_check
      %p49 = pneg %p48
    $region19: #{tpu_custom_call.1} parent=1 // pred_check_branch
      %51 = sbr.rel (%p49) target = $region21
    $region20: #{tpu_custom_call.1} parent=1 // pred_region
      %52 = vst [vmem:[#allocation7] sm:$0xff] 0.0
    $region21: #{tpu_custom_call.1} parent=1 // pred_fallthru
      _
    %v53 = vld [vmem:[#allocation2] sm:$0xff]
    %v54 = vld [vmem:[#allocation2 + $0x8] sm:$0xff]
    %v55 = vld [vmem:[#allocation2 + $0x10] sm:$0xff]
    %v56 = vld [vmem:[#allocation2 + $0x18] sm:$0xff]
    %v57 = vld [vmem:[#allocation5] sm:$0xff]
    %v58 = vunpack.c.0.s8 %v57
    %v59 = vunpack.c.1.s8 %v57
    %v60 = vunpack.c.2.s8 %v57
    %v61 = vunpack.c.3.s8 %v57
    %v62 = vcvt.s32.f32 %v58
    %v63 = vcvt.s32.f32 %v59
    %v64 = vcvt.s32.f32 %v60
    %v65 = vcvt.s32.f32 %v61
    %66 = vadd.xlane.f32.xlu0 %v62
    %v67 = vpop.xlane.xlu0 %66
    %68 = vadd.xlane.f32.xlu0 %v63
    %v69 = vpop.xlane.xlu0 %68
    %70 = vadd.xlane.f32.xlu0 %v64
    %v71 = vpop.xlane.xlu0 %70
    %72 = vadd.xlane.f32.xlu0 %v65
    %v73 = vpop.xlane.xlu0 %72
    %v74 = vmax.f32 %v53, 0.0
    %v75 = vmax.f32 %v54, 0.0
    %v76 = vmax.f32 %v55, 0.0
    %v77 = vmax.f32 %v56, 0.0
    %v78 = vand.u32 2147483647, %v53
    %v79 = vand.u32 2147483647, %v54
    %v80 = vand.u32 2147483647, %v55
    %v81 = vand.u32 2147483647, %v56
    %v82 = vsub.f32 0.0, %v78
    %v83 = vsub.f32 0.0, %v79
    %v84 = vsub.f32 0.0, %v80
    %v85 = vsub.f32 0.0, %v81
    %v86 = vmul.f32 %v82, 1.442695
    %v87 = vpow.pop %v86
    %v88 = vmul.f32 %v83, 1.442695
    %v89 = vpow.pop %v88
    %v90 = vmul.f32 %v84, 1.442695
    %v91 = vpow.pop %v90
    %v92 = vmul.f32 %v85, 1.442695
    %v93 = vpow.pop %v92
    %v94 = vadd.f32 %v87, 1.0
    %v95 = vadd.f32 %v89, 1.0
    %v96 = vadd.f32 %v91, 1.0
    %v97 = vadd.f32 %v93, 1.0
    %v98 = vlog2.pop %v94
    %v99 = vmul.f32 %v98, 0.6931472
    %v100 = vlog2.pop %v95
    %v101 = vmul.f32 %v100, 0.6931472
    %v102 = vlog2.pop %v96
    %v103 = vmul.f32 %v102, 0.6931472
    %v104 = vlog2.pop %v97
    %v105 = vmul.f32 %v104, 0.6931472
    %v106 = vadd.f32 %v74, %v99
    %v107 = vadd.f32 %v75, %v101
    %v108 = vadd.f32 %v76, %v103
    %v109 = vadd.f32 %v77, %v105
    %v110 = vsub.f32 %v106, %v53
    %v111 = vsub.f32 %v107, %v54
    %v112 = vsub.f32 %v108, %v55
    %v113 = vsub.f32 %v109, %v56
    %v114 = vmin.f32 %v110, 100.0
    %v115 = vmin.f32 %v111, 100.0
    %v116 = vmin.f32 %v112, 100.0
    %v117 = vmin.f32 %v113, 100.0
    %v118 = vmin.f32 %v106, 100.0
    %v119 = vmin.f32 %v107, 100.0
    %v120 = vmin.f32 %v108, 100.0
    %v121 = vmin.f32 %v109, 100.0
    %v122 = vsub.f32 %v114, %v118
    %v123 = vsub.f32 %v115, %v119
    %v124 = vsub.f32 %v116, %v120
    %v125 = vsub.f32 %v117, %v121
    %v126 = vmul.f32 %v62, %v122
    %v127 = vmul.f32 %v63, %v123
    %v128 = vmul.f32 %v64, %v124
    %v129 = vmul.f32 %v65, %v125
    %v130 = vadd.f32 %v118, %v126
    %v131 = vadd.f32 %v119, %v127
    %v132 = vadd.f32 %v120, %v128
    %v133 = vadd.f32 %v121, %v129
    %vm134 = vcmp.eq.f32.partialorder %v62, 1.0
    %vm135 = vcmp.eq.f32.partialorder %v63, 1.0
    %vm136 = vcmp.eq.f32.partialorder %v64, 1.0
    %vm137 = vcmp.eq.f32.partialorder %v65, 1.0
    %v138 = vsub.f32 128.0, %v67
    %v139 = vsub.f32 128.0, %v69
    %v140 = vsub.f32 128.0, %v71
    %v141 = vsub.f32 128.0, %v73
    %v142 = vsel %vm134, %v138, %v67
    %v143 = vsel %vm135, %v139, %v69
    %v144 = vsel %vm136, %v140, %v71
    %v145 = vsel %vm137, %v141, %v73
    %v146 = vmul.f32 %v142, %v130
    %v147 = vmul.f32 %v143, %v131
    %v148 = vmul.f32 %v144, %v132
    %v149 = vmul.f32 %v145, %v133
    %v150 = vld [vmem:[#allocation7] sm:$0xff]
    %v151 = vadd.f32 %v146, %v147
    %v152 = vadd.f32 %v151, %v148
    %v153 = vadd.f32 %v152, %v149
    %v154 = vadd.f32 %v150, %v153
    %155 = vst [vmem:[#allocation7] sm:$0xff] %v154
    // Predicated region
    $region22: #{tpu_custom_call.1} parent=1 // pred_check
      _
    $region23: #{tpu_custom_call.1} parent=1 // pred_check_branch
      %157 = sbr.rel (0) target = $region25
    $region24: #{tpu_custom_call.1} parent=1 // pred_region
      %s159 = ssub.s32 128, 128
      %160 = vsyncadd [#allocation4], %s159
      %s162 = sshll.u32 [#allocation7], 4
      %s163 = int_to_ptr.vmem [resolvable:$true] %s162
      %165 = dma.vmem_to_hbm [thread:$0]  %s163, 128, %s2, [#allocation4]
    $region25: #{tpu_custom_call.1} parent=1 // pred_fallthru
      _
    // Predicated region
    $region26: #{tpu_custom_call.1} parent=1 // pred_check
      _
    $region27: #{tpu_custom_call.1} parent=1 // pred_check_branch
      %167 = sbr.rel (0) target = $region29
    $region28: #{tpu_custom_call.1} parent=1 // pred_region
      %168 = dma.done [#allocation4], 128
    $region29: #{tpu_custom_call.1} parent=1 // pred_fallthru
      _
    %169 = vsyncpa [#allocation3], 1
    %170 = vsyncpa [#allocation6], 1
    %171 = vsyncpa [#allocation4], 1

</llo_original>
